<compile_context>
chip_gen: v7x
topology: tpu7x:2x2x1
jax: 0.10.0
libtpu: 0.0.40
codegen_flags: <defaults>
</compile_context>

<pallas_src>
import functools

import jax
import jax.numpy as jnp
from jax.experimental import pallas as pl
from jax.experimental.pallas import tpu as pltpu

LANE = 128                       # lane width (hardware)
SUBLANE = 8                      # f32 sublane tile
TARGET_BLOCK_BYTES = 2 * 1024 * 1024   # ~2 MiB per input block (dtype-aware rows)
MIN_PALLAS_ELEMS = 64 * 1024           # below this, a fused XLA reduction wins


def _l2_partial_kernel(x_ref, y_ref, o_ref, *, tm, rows):
    """Accumulate sum((x - y)**2) of this row tile into the resident (8,128) o_ref."""
    i = pl.program_id(0)

    @pl.when(i == 0)
    def _():
        o_ref[...] = jnp.zeros_like(o_ref)

    # Cast to f32 in-kernel (hidden under the DMA), square the difference.
    d = x_ref[...].astype(jnp.float32) - y_ref[...].astype(jnp.float32)
    sq = d * d

    def _accumulate(vals):
        # Collapse only the row axis (pure VPU adds, no cross-lane work yet).
        o_ref[...] += vals.reshape(tm // SUBLANE, SUBLANE, LANE).sum(axis=0)

    if rows % tm != 0:
        # Ragged last tile: only the final grid step pays the iota/compare/select.
        last = pl.num_programs(0) - 1

        @pl.when(i < last)
        def _():
            _accumulate(sq)

        @pl.when(i == last)
        def _():
            row_id = jax.lax.broadcasted_iota(jnp.int32, (tm, LANE), 0)
            valid = rows - i * tm          # real rows in this (partial) tile
            _accumulate(jnp.where(row_id < valid, sq, 0.0))
    else:
        _accumulate(sq)


def _xla_sum_squares(x, y):
    d = x.astype(jnp.float32) - y.astype(jnp.float32)
    return jnp.sum(d * d)


def l2_sum_squares(x, y, *, block_rows=None, min_pallas_elems=MIN_PALLAS_ELEMS):
    """sum((x - y)**2) over all elements (f32 accumulation)."""
    assert x.shape == y.shape, "x and y must have identical shapes"
    n = x.size
    if n == 0:
        return jnp.float32(0.0)

    itemsize = x.dtype.itemsize
    # Row alignment so blocks line up with native sublane packing:
    # f32 -> 8 rows, bf16/f16 -> 16 rows, int8/fp8 -> 32 rows.
    row_align = SUBLANE * max(1, 4 // itemsize)
    rows = n // LANE

    # Small-input fast path: kernel launch + grid + DMA priming dominates tiny
    # losses; a fused XLA reduction is strictly faster there.
    if n < min_pallas_elems or rows < row_align:
        return _xla_sum_squares(x, y)

    # Dtype-aware tile rows targeting ~2 MiB per input block.
    if block_rows is None:
        block_rows = max(row_align, TARGET_BLOCK_BYTES // (LANE * itemsize))
    tm = max(row_align, min(int(block_rows), (rows // row_align) * row_align))

    xf = x.reshape(-1)
    yf = y.reshape(-1)
    bulk = rows * LANE
    tail = n - bulk                # 0..127 leftover elements

    if tail:
        # TODO(synk): XLA may materialize this prefix slice; it is still no worse
        # than padding both full tensors, and the common multiple-of-128 case
        # below stays copy-free.
        xb, yb = xf[:bulk], yf[:bulk]
    else:
        xb, yb = xf, yf            # pure reshape below, no data movement

    x2 = xb.reshape(rows, LANE)
    y2 = yb.reshape(rows, LANE)

    grid = pl.cdiv(rows, tm)
    kernel = functools.partial(_l2_partial_kernel, tm=tm, rows=rows)

    partial = pl.pallas_call(
        kernel,
        out_shape=jax.ShapeDtypeStruct((SUBLANE, LANE), jnp.float32),
        grid_spec=pltpu.PrefetchScalarGridSpec(
            num_scalar_prefetch=0,
            grid=(grid,),
            in_specs=[
                pl.BlockSpec((tm, LANE), lambda i: (i, 0)),
                pl.BlockSpec((tm, LANE), lambda i: (i, 0)),
            ],
            out_specs=pl.BlockSpec((SUBLANE, LANE), lambda i: (0, 0)),
        ),
        compiler_params=pltpu.CompilerParams(
            dimension_semantics=("arbitrary",),
        ),
    )(x2, y2)

    # Final tiny cross-lane reduce (8*128 floats) done by XLA.
    total = jnp.sum(partial)
    if tail:
        total = total + _xla_sum_squares(xf[bulk:], yf[bulk:])
    return total


def l2_loss(x, y, weight=1.0, *, block_rows=None, min_pallas_elems=MIN_PALLAS_ELEMS):
    """weight * mean((x - y)**2)."""
    n = x.size
    if n == 0:
        # torch's .mean() of an empty tensor is NaN.
        return jnp.float32(weight) * jnp.float32(jnp.nan)
    s = l2_sum_squares(x, y, block_rows=block_rows, min_pallas_elems=min_pallas_elems)
    return jnp.float32(weight) * s / jnp.float32(n)


class L2:
    """JAX/Pallas port of the PyTorch L2 module (no learned parameters)."""

    def __init__(self, weight=1, **kwargs):
        self.weight = float(weight)

    def __call__(self, x, y):
        return l2_loss(x, y, weight=self.weight)


if __name__ == "__main__":
    key = jax.random.PRNGKey(0)
    k = jax.random.split(key, 8)

    module = L2(weight=1)

    # 1) Primary tiny NCHW case: takes the small-input XLA fast path.
    x = jax.random.normal(k[0], (2, 4, 16, 16), dtype=jnp.float32)
    y = jax.random.normal(k[1], (2, 4, 16, 16), dtype=jnp.float32)
    out = jax.block_until_ready(module(x, y))
    ref = jnp.mean((x - y) ** 2)
    assert jnp.allclose(out, ref, rtol=1e-4, atol=1e-6), (out, ref)

    # 2) Kernel path with default settings: n is a multiple of 128, so the
    #    tensors are only reshaped (no pad, no copies).
    xk = jax.random.normal(k[2], (2, 4, 128, 130), dtype=jnp.float32)
    yk = jax.random.normal(k[3], (2, 4, 128, 130), dtype=jnp.float32)
    outk = jax.block_until_ready(module(xk, yk))
    refk = jnp.mean((xk - yk) ** 2)
    assert jnp.allclose(outk, refk, rtol=1e-4, atol=1e-6), (outk, refk)

    # 3) Forced multi-tile kernel path with a ragged last tile AND a <128-element
    #    tail, in bf16 (exercises the in-kernel cast, the gated mask and the
    #    tail fold-in).  Small block_rows keeps the test shape small.
    xb = jax.random.normal(k[4], (3, 7, 41, 13), dtype=jnp.bfloat16)
    yb = jax.random.normal(k[5], (3, 7, 41, 13), dtype=jnp.bfloat16)
    outb = jax.block_until_ready(
        l2_loss(xb, yb, weight=1.0, block_rows=32, min_pallas_elems=0))
    refb = jnp.mean((xb.astype(jnp.float32) - yb.astype(jnp.float32)) ** 2)
    assert jnp.allclose(outb, refb, rtol=1e-4, atol=1e-6), (outb, refb)

    # 4) Tiny odd-shaped bf16 input through the module (fast path, correctness).
    xt = jax.random.normal(k[6], (3, 5, 7), dtype=jnp.bfloat16)
    yt = jax.random.normal(k[7], (3, 5, 7), dtype=jnp.bfloat16)
    outt = jax.block_until_ready(module(xt, yt))
    reft = jnp.mean((xt.astype(jnp.float32) - yt.astype(jnp.float32)) ** 2)
    assert jnp.allclose(outt, reft, rtol=1e-4, atol=1e-6), (outt, reft)

    print("KERNEL_OK")
</pallas_src>

<mosaic_0001>
module attributes {stable_mosaic.version = 11 : i64} {
  func.func @_l2_partial_kernel(%arg0: i32, %arg1: memref<1040x128xf32, #tpu.memory_space<vmem>>, %arg2: memref<1040x128xf32, #tpu.memory_space<vmem>>, %arg3: memref<8x128xf32, #tpu.memory_space<vmem>>) attributes {dimension_semantics = [#tpu.dimension_semantics<arbitrary>], iteration_bounds = array<i64: 1>, scalar_prefetch = 0 : i64, scratch_operands = 0 : i64, tpu.core_type = #tpu.core_type<tc>, window_params = [{transform_indices = @transform_0, window_bounds = array<i64: 1040, 128>}, {transform_indices = @transform_1, window_bounds = array<i64: 1040, 128>}, {pipeline_mode = #tpu.pipeline_mode<synchronous>, transform_indices = @transform_2, window_bounds = array<i64: 8, 128>}]} {
    %c0_i32 = arith.constant 0 : i32
    %0 = arith.cmpi eq, %arg0, %c0_i32 : i32
    %1 = arith.extui %0 : i1 to i32
    %c0_i32_0 = arith.constant 0 : i32
    %2 = arith.cmpi ne, %1, %c0_i32_0 : i32
    scf.if %2 {
      %cst_8 = arith.constant 0.000000e+00 : f32
      %12 = vector.broadcast %cst_8 : f32 to vector<8x128xf32>
      %c0_9 = arith.constant 0 : index
      %c0_10 = arith.constant 0 : index
      %13 = vector.load %arg3[%c0_9, %c0_10] : memref<8x128xf32, #tpu.memory_space<vmem>>, vector<8x128xf32>
      tpu.vector_store %arg3[%c0_9, %c0_10], %12 {strides = array<i32>} : memref<8x128xf32, #tpu.memory_space<vmem>>, vector<8x128xf32>,
    } else {
    }
    %c0 = arith.constant 0 : index
    %c0_1 = arith.constant 0 : index
    %3 = vector.load %arg1[%c0, %c0_1] : memref<1040x128xf32, #tpu.memory_space<vmem>>, vector<1040x128xf32>
    %c0_2 = arith.constant 0 : index
    %c0_3 = arith.constant 0 : index
    %4 = vector.load %arg2[%c0_2, %c0_3] : memref<1040x128xf32, #tpu.memory_space<vmem>>, vector<1040x128xf32>
    %5 = arith.subf %3, %4 : vector<1040x128xf32>
    %6 = arith.mulf %5, %5 : vector<1040x128xf32>
    %c0_4 = arith.constant 0 : index
    %c0_5 = arith.constant 0 : index
    %7 = vector.load %arg3[%c0_4, %c0_5] : memref<8x128xf32, #tpu.memory_space<vmem>>, vector<8x128xf32>
    %8 = vector.shape_cast %6 : vector<1040x128xf32> to vector<130x8x128xf32>
    %cst = arith.constant dense<0.000000e+00> : vector<8x128xf32>
    %9 = vector.multi_reduction <add>, %8, %cst [0] : vector<130x8x128xf32> to vector<8x128xf32>
    %10 = arith.addf %7, %9 : vector<8x128xf32>
    %c0_6 = arith.constant 0 : index
    %c0_7 = arith.constant 0 : index
    %11 = vector.load %arg3[%c0_6, %c0_7] : memref<8x128xf32, #tpu.memory_space<vmem>>, vector<8x128xf32>
    tpu.vector_store %arg3[%c0_6, %c0_7], %10 {strides = array<i32>} : memref<8x128xf32, #tpu.memory_space<vmem>>, vector<8x128xf32>,
    return
  }
  func.func @transform_0(%arg0: i32) -> (i32, i32) {
    %c0_i32 = arith.constant 0 : i32
    %c0_i32_0 = arith.constant 0 : i32
    return %arg0, %c0_i32 : i32, i32
  }
  func.func @transform_1(%arg0: i32) -> (i32, i32) {
    %c0_i32 = arith.constant 0 : i32
    %c0_i32_0 = arith.constant 0 : i32
    return %arg0, %c0_i32 : i32, i32
  }
  func.func @transform_2(%arg0: i32) -> (i32, i32) {
    %c0_i32 = arith.constant 0 : i32
    %c0_i32_0 = arith.constant 0 : i32
    %c0_i32_1 = arith.constant 0 : i32
    return %c0_i32, %c0_i32_0 : i32, i32
  }
}

</mosaic_0001>

<llo_original>
// kernel: tpu_custom_call.1
$region0: #{tpu_custom_call.1}
  #allocation0 [shape = 'u32[]', space=smem, size = 0x4, offset = 0x4, fixed_abs, tag = 'smem constant byte address 0x4 - core index']
  #allocation1 [shape = 'u32[144,128]{1,0:T(1,128)}', space=vmem, size = 0x12000, scoped, tag = 'internal scratch']
  %s0 = inlined_call_operand.hbm [shape: f32[1040,128], index: 0, kind: input, shape index: {}]
  %s1 = inlined_call_operand.hbm [shape: f32[1040,128], index: 1, kind: input, shape index: {}]
  %s2 = inlined_call_operand.hbm [shape: f32[8,128], index: 2, kind: output, shape index: {}]
  %s3 = sld [smem:[#allocation0]]
  $region30: #{tpu_custom_call.1} parent=0
    _
  %s5 = ssub.s32 1, %s3
  %s6 = scalar_select 0, %s5, %s3
  $region1: #{tpu_custom_call.1} parent=0
    #allocation2 [shape = 'u8[532480]{0}', space=vmem, size = 0x82000, scoped, tag = 'input window, operand 0, single buffered']
    #allocation3 [shape = 's32[1]{0}', space=sflag, size = 0x4, scoped, tag = 'scoped memory for tpu_custom_call.1']
    #allocation4 [shape = 's32[1]{0}', space=sflag, size = 0x4, scoped, tag = 'scoped memory for tpu_custom_call.1']
    #allocation5 [shape = 'u8[532480]{0}', space=vmem, size = 0x82000, scoped, tag = 'input window, operand 1, single buffered']
    #allocation6 [shape = 's32[1]{0}', space=sflag, size = 0x4, scoped, tag = 'scoped memory for tpu_custom_call.1']
    #allocation7 [shape = 'u8[4096]{0}', space=vmem, size = 0x1000, scoped, tag = 'output window, operand 0, single buffered']
    %7 = vsyncpa [#allocation3], 0
    %8 = vsyncpa [#allocation6], 0
    %9 = vsyncpa [#allocation4], 0
    // Predicated region
    $region2: #{tpu_custom_call.1} parent=1 // pred_check
      _
    $region3: #{tpu_custom_call.1} parent=1 // pred_check_branch
      %11 = sbr.rel (0) target = $region5
    $region4: #{tpu_custom_call.1} parent=1 // pred_region
      %s13 = ssub.s32 16640, 16640
      %14 = vsyncadd [#allocation3], %s13
      %s15 = sshll.u32 [#allocation2], 4
      %s16 = int_to_ptr.vmem [resolvable:$true] %s15
      %21 = dma.hbm_to_vmem [thread:$0]  %s0, 16640, %s16, [#allocation3], 128, 128, 8
    $region5: #{tpu_custom_call.1} parent=1 // pred_fallthru
      _
    // Predicated region
    $region6: #{tpu_custom_call.1} parent=1 // pred_check
      _
    $region7: #{tpu_custom_call.1} parent=1 // pred_check_branch
      %23 = sbr.rel (0) target = $region9
    $region8: #{tpu_custom_call.1} parent=1 // pred_region
      %s25 = ssub.s32 16640, 16640
      %26 = vsyncadd [#allocation6], %s25
      %s27 = sshll.u32 [#allocation5], 4
      %s28 = int_to_ptr.vmem [resolvable:$true] %s27
      %33 = dma.hbm_to_vmem [thread:$0]  %s1, 16640, %s28, [#allocation6], 128, 128, 8
    $region9: #{tpu_custom_call.1} parent=1 // pred_fallthru
      _
    // Predicated region
    $region10: #{tpu_custom_call.1} parent=1 // pred_check
      _
    $region11: #{tpu_custom_call.1} parent=1 // pred_check_branch
      %35 = sbr.rel (0) target = $region13
    $region12: #{tpu_custom_call.1} parent=1 // pred_region
      %36 = dma.done [#allocation3], 16640
    $region13: #{tpu_custom_call.1} parent=1 // pred_fallthru
      _
    // Predicated region
    $region14: #{tpu_custom_call.1} parent=1 // pred_check
      _
    $region15: #{tpu_custom_call.1} parent=1 // pred_check_branch
      %38 = sbr.rel (0) target = $region17
    $region16: #{tpu_custom_call.1} parent=1 // pred_region
      %39 = dma.done [#allocation6], 16640
    $region17: #{tpu_custom_call.1} parent=1 // pred_fallthru
      _
    %p40 = scmp.eq.s32.totalorder 0, 0
    // Predicated region
    $region18: #{tpu_custom_call.1} parent=1 // pred_check
      %p41 = pneg %p40
    $region19: #{tpu_custom_call.1} parent=1 // pred_check_branch
      %43 = sbr.rel (%p41) target = $region21
    $region20: #{tpu_custom_call.1} parent=1 // pred_region
      %44 = vst [vmem:[#allocation7] sm:$0xff] 0.0
    $region21: #{tpu_custom_call.1} parent=1 // pred_fallthru
      _
    %v45 = vld [vmem:[#allocation2] sm:$0xff]
    %v46 = vld [vmem:[#allocation2 + $0x8] sm:$0xff]
    %v47 = vld [vmem:[#allocation2 + $0x10] sm:$0xff]
    %v48 = vld [vmem:[#allocation2 + $0x18] sm:$0xff]
    %v49 = vld [vmem:[#allocation2 + $0x20] sm:$0xff]
    %v50 = vld [vmem:[#allocation2 + $0x28] sm:$0xff]
    %v51 = vld [vmem:[#allocation2 + $0x30] sm:$0xff]
    %v52 = vld [vmem:[#allocation2 + $0x38] sm:$0xff]
    %v53 = vld [vmem:[#allocation2 + $0x40] sm:$0xff]
    %v54 = vld [vmem:[#allocation2 + $0x48] sm:$0xff]
    %v55 = vld [vmem:[#allocation2 + $0x50] sm:$0xff]
    %v56 = vld [vmem:[#allocation2 + $0x58] sm:$0xff]
    %v57 = vld [vmem:[#allocation2 + $0x60] sm:$0xff]
    %v58 = vld [vmem:[#allocation2 + $0x68] sm:$0xff]
    %v59 = vld [vmem:[#allocation2 + $0x70] sm:$0xff]
    %v60 = vld [vmem:[#allocation2 + $0x78] sm:$0xff]
    %v61 = vld [vmem:[#allocation2 + $0x80] sm:$0xff]
    %v62 = vld [vmem:[#allocation2 + $0x88] sm:$0xff]
    %v63 = vld [vmem:[#allocation2 + $0x90] sm:$0xff]
    %v64 = vld [vmem:[#allocation2 + $0x98] sm:$0xff]
    %v65 = vld [vmem:[#allocation2 + $0xa0] sm:$0xff]
    %v66 = vld [vmem:[#allocation2 + $0xa8] sm:$0xff]
    %v67 = vld [vmem:[#allocation2 + $0xb0] sm:$0xff]
    %v68 = vld [vmem:[#allocation2 + $0xb8] sm:$0xff]
    %v69 = vld [vmem:[#allocation2 + $0xc0] sm:$0xff]
    %v70 = vld [vmem:[#allocation2 + $0xc8] sm:$0xff]
    %v71 = vld [vmem:[#allocation2 + $0xd0] sm:$0xff]
    %v72 = vld [vmem:[#allocation2 + $0xd8] sm:$0xff]
    %v73 = vld [vmem:[#allocation2 + $0xe0] sm:$0xff]
    %v74 = vld [vmem:[#allocation2 + $0xe8] sm:$0xff]
    %v75 = vld [vmem:[#allocation2 + $0xf0] sm:$0xff]
    %v76 = vld [vmem:[#allocation2 + $0xf8] sm:$0xff]
    %v77 = vld [vmem:[#allocation2 + $0x100] sm:$0xff]
    %v78 = vld [vmem:[#allocation2 + $0x108] sm:$0xff]
    %v79 = vld [vmem:[#allocation2 + $0x110] sm:$0xff]
    %v80 = vld [vmem:[#allocation2 + $0x118] sm:$0xff]
    %v81 = vld [vmem:[#allocation2 + $0x120] sm:$0xff]
    %v82 = vld [vmem:[#allocation2 + $0x128] sm:$0xff]
    %v83 = vld [vmem:[#allocation2 + $0x130] sm:$0xff]
    %v84 = vld [vmem:[#allocation2 + $0x138] sm:$0xff]
    %v85 = vld [vmem:[#allocation2 + $0x140] sm:$0xff]
    %v86 = vld [vmem:[#allocation2 + $0x148] sm:$0xff]
    %v87 = vld [vmem:[#allocation2 + $0x150] sm:$0xff]
    %v88 = vld [vmem:[#allocation2 + $0x158] sm:$0xff]
    %v89 = vld [vmem:[#allocation2 + $0x160] sm:$0xff]
    %v90 = vld [vmem:[#allocation2 + $0x168] sm:$0xff]
    %v91 = vld [vmem:[#allocation2 + $0x170] sm:$0xff]
    %v92 = vld [vmem:[#allocation2 + $0x178] sm:$0xff]
    %v93 = vld [vmem:[#allocation2 + $0x180] sm:$0xff]
    %v94 = vld [vmem:[#allocation2 + $0x188] sm:$0xff]
    %v95 = vld [vmem:[#allocation2 + $0x190] sm:$0xff]
    %v96 = vld [vmem:[#allocation2 + $0x198] sm:$0xff]
    %v97 = vld [vmem:[#allocation2 + $0x1a0] sm:$0xff]
    %v98 = vld [vmem:[#allocation2 + $0x1a8] sm:$0xff]
    %v99 = vld [vmem:[#allocation2 + $0x1b0] sm:$0xff]
    %v100 = vld [vmem:[#allocation2 + $0x1b8] sm:$0xff]
    %v101 = vld [vmem:[#allocation2 + $0x1c0] sm:$0xff]
    %v102 = vld [vmem:[#allocation2 + $0x1c8] sm:$0xff]
    %v103 = vld [vmem:[#allocation2 + $0x1d0] sm:$0xff]
    %v104 = vld [vmem:[#allocation2 + $0x1d8] sm:$0xff]
    %v105 = vld [vmem:[#allocation2 + $0x1e0] sm:$0xff]
    %v106 = vld [vmem:[#allocation2 + $0x1e8] sm:$0xff]
    %v107 = vld [vmem:[#allocation2 + $0x1f0] sm:$0xff]
    %v108 = vld [vmem:[#allocation2 + $0x1f8] sm:$0xff]
    %v109 = vld [vmem:[#allocation2 + $0x200] sm:$0xff]
    %v110 = vld [vmem:[#allocation2 + $0x208] sm:$0xff]
    %v111 = vld [vmem:[#allocation2 + $0x210] sm:$0xff]
    %v112 = vld [vmem:[#allocation2 + $0x218] sm:$0xff]
    %v113 = vld [vmem:[#allocation2 + $0x220] sm:$0xff]
    %v114 = vld [vmem:[#allocation2 + $0x228] sm:$0xff]
    %v115 = vld [vmem:[#allocation2 + $0x230] sm:$0xff]
    %v116 = vld [vmem:[#allocation2 + $0x238] sm:$0xff]
    %v117 = vld [vmem:[#allocation2 + $0x240] sm:$0xff]
    %v118 = vld [vmem:[#allocation2 + $0x248] sm:$0xff]
    %v119 = vld [vmem:[#allocation2 + $0x250] sm:$0xff]
    %v120 = vld [vmem:[#allocation2 + $0x258] sm:$0xff]
    %v121 = vld [vmem:[#allocation2 + $0x260] sm:$0xff]
    %v122 = vld [vmem:[#allocation2 + $0x268] sm:$0xff]
    %v123 = vld [vmem:[#allocation2 + $0x270] sm:$0xff]
    %v124 = vld [vmem:[#allocation2 + $0x278] sm:$0xff]
    %v125 = vld [vmem:[#allocation2 + $0x280] sm:$0xff]
    %v126 = vld [vmem:[#allocation2 + $0x288] sm:$0xff]
    %v127 = vld [vmem:[#allocation2 + $0x290] sm:$0xff]
    %v128 = vld [vmem:[#allocation2 + $0x298] sm:$0xff]
    %v129 = vld [vmem:[#allocation2 + $0x2a0] sm:$0xff]
    %v130 = vld [vmem:[#allocation2 + $0x2a8] sm:$0xff]
    %v131 = vld [vmem:[#allocation2 + $0x2b0] sm:$0xff]
    %v132 = vld [vmem:[#allocation2 + $0x2b8] sm:$0xff]
    %v133 = vld [vmem:[#allocation2 + $0x2c0] sm:$0xff]
    %v134 = vld [vmem:[#allocation2 + $0x2c8] sm:$0xff]
    %v135 = vld [vmem:[#allocation2 + $0x2d0] sm:$0xff]
    %v136 = vld [vmem:[#allocation2 + $0x2d8] sm:$0xff]
    %v137 = vld [vmem:[#allocation2 + $0x2e0] sm:$0xff]
    %v138 = vld [vmem:[#allocation2 + $0x2e8] sm:$0xff]
    %v139 = vld [vmem:[#allocation2 + $0x2f0] sm:$0xff]
    %v140 = vld [vmem:[#allocation2 + $0x2f8] sm:$0xff]
    %v141 = vld [vmem:[#allocation2 + $0x300] sm:$0xff]
    %v142 = vld [vmem:[#allocation2 + $0x308] sm:$0xff]
    %v143 = vld [vmem:[#allocation2 + $0x310] sm:$0xff]
    %v144 = vld [vmem:[#allocation2 + $0x318] sm:$0xff]
    %v145 = vld [vmem:[#allocation2 + $0x320] sm:$0xff]
    %v146 = vld [vmem:[#allocation2 + $0x328] sm:$0xff]
    %v147 = vld [vmem:[#allocation2 + $0x330] sm:$0xff]
    %v148 = vld [vmem:[#allocation2 + $0x338] sm:$0xff]
    %v149 = vld [vmem:[#allocation2 + $0x340] sm:$0xff]
    %v150 = vld [vmem:[#allocation2 + $0x348] sm:$0xff]
    %v151 = vld [vmem:[#allocation2 + $0x350] sm:$0xff]
    %v152 = vld [vmem:[#allocation2 + $0x358] sm:$0xff]
    %v153 = vld [vmem:[#allocation2 + $0x360] sm:$0xff]
    %v154 = vld [vmem:[#allocation2 + $0x368] sm:$0xff]
    %v155 = vld [vmem:[#allocation2 + $0x370] sm:$0xff]
    %v156 = vld [vmem:[#allocation2 + $0x378] sm:$0xff]
    %v157 = vld [vmem:[#allocation2 + $0x380] sm:$0xff]
    %v158 = vld [vmem:[#allocation2 + $0x388] sm:$0xff]
    %v159 = vld [vmem:[#allocation2 + $0x390] sm:$0xff]
    %v160 = vld [vmem:[#allocation2 + $0x398] sm:$0xff]
    %v161 = vld [vmem:[#allocation2 + $0x3a0] sm:$0xff]
    %v162 = vld [vmem:[#allocation2 + $0x3a8] sm:$0xff]
    %v163 = vld [vmem:[#allocation2 + $0x3b0] sm:$0xff]
    %v164 = vld [vmem:[#allocation2 + $0x3b8] sm:$0xff]
    %v165 = vld [vmem:[#allocation2 + $0x3c0] sm:$0xff]
    %v166 = vld [vmem:[#allocation2 + $0x3c8] sm:$0xff]
    %v167 = vld [vmem:[#allocation2 + $0x3d0] sm:$0xff]
    %v168 = vld [vmem:[#allocation2 + $0x3d8] sm:$0xff]
    %v169 = vld [vmem:[#allocation2 + $0x3e0] sm:$0xff]
    %v170 = vld [vmem:[#allocation2 + $0x3e8] sm:$0xff]
    %v171 = vld [vmem:[#allocation2 + $0x3f0] sm:$0xff]
    %v172 = vld [vmem:[#allocation2 + $0x3f8] sm:$0xff]
    %v173 = vld [vmem:[#allocation2 + $0x400] sm:$0xff]
    %v174 = vld [vmem:[#allocation2 + $0x408] sm:$0xff]
    %v175 = vld [vmem:[#allocation5] sm:$0xff]
    %v176 = vld [vmem:[#allocation5 + $0x8] sm:$0xff]
    %v177 = vld [vmem:[#allocation5 + $0x10] sm:$0xff]
    %v178 = vld [vmem:[#allocation5 + $0x18] sm:$0xff]
    %v179 = vld [vmem:[#allocation5 + $0x20] sm:$0xff]
    %v180 = vld [vmem:[#allocation5 + $0x28] sm:$0xff]
    %v181 = vld [vmem:[#allocation5 + $0x30] sm:$0xff]
    %v182 = vld [vmem:[#allocation5 + $0x38] sm:$0xff]
    %v183 = vld [vmem:[#allocation5 + $0x40] sm:$0xff]
    %v184 = vld [vmem:[#allocation5 + $0x48] sm:$0xff]
    %v185 = vld [vmem:[#allocation5 + $0x50] sm:$0xff]
    %v186 = vld [vmem:[#allocation5 + $0x58] sm:$0xff]
    %v187 = vld [vmem:[#allocation5 + $0x60] sm:$0xff]
    %v188 = vld [vmem:[#allocation5 + $0x68] sm:$0xff]
    %v189 = vld [vmem:[#allocation5 + $0x70] sm:$0xff]
    %v190 = vld [vmem:[#allocation5 + $0x78] sm:$0xff]
    %v191 = vld [vmem:[#allocation5 + $0x80] sm:$0xff]
    %v192 = vld [vmem:[#allocation5 + $0x88] sm:$0xff]
    %v193 = vld [vmem:[#allocation5 + $0x90] sm:$0xff]
    %v194 = vld [vmem:[#allocation5 + $0x98] sm:$0xff]
    %v195 = vld [vmem:[#allocation5 + $0xa0] sm:$0xff]
    %v196 = vld [vmem:[#allocation5 + $0xa8] sm:$0xff]
    %v197 = vld [vmem:[#allocation5 + $0xb0] sm:$0xff]
    %v198 = vld [vmem:[#allocation5 + $0xb8] sm:$0xff]
    %v199 = vld [vmem:[#allocation5 + $0xc0] sm:$0xff]
    %v200 = vld [vmem:[#allocation5 + $0xc8] sm:$0xff]
    %v201 = vld [vmem:[#allocation5 + $0xd0] sm:$0xff]
    %v202 = vld [vmem:[#allocation5 + $0xd8] sm:$0xff]
    %v203 = vld [vmem:[#allocation5 + $0xe0] sm:$0xff]
    %v204 = vld [vmem:[#allocation5 + $0xe8] sm:$0xff]
    %v205 = vld [vmem:[#allocation5 + $0xf0] sm:$0xff]
    %v206 = vld [vmem:[#allocation5 + $0xf8] sm:$0xff]
    %v207 = vld [vmem:[#allocation5 + $0x100] sm:$0xff]
    %v208 = vld [vmem:[#allocation5 + $0x108] sm:$0xff]
    %v209 = vld [vmem:[#allocation5 + $0x110] sm:$0xff]
    %v210 = vld [vmem:[#allocation5 + $0x118] sm:$0xff]
    %v211 = vld [vmem:[#allocation5 + $0x120] sm:$0xff]
    %v212 = vld [vmem:[#allocation5 + $0x128] sm:$0xff]
    %v213 = vld [vmem:[#allocation5 + $0x130] sm:$0xff]
    %v214 = vld [vmem:[#allocation5 + $0x138] sm:$0xff]
    %v215 = vld [vmem:[#allocation5 + $0x140] sm:$0xff]
    %v216 = vld [vmem:[#allocation5 + $0x148] sm:$0xff]
    %v217 = vld [vmem:[#allocation5 + $0x150] sm:$0xff]
    %v218 = vld [vmem:[#allocation5 + $0x158] sm:$0xff]
    %v219 = vld [vmem:[#allocation5 + $0x160] sm:$0xff]
    %v220 = vld [vmem:[#allocation5 + $0x168] sm:$0xff]
    %v221 = vld [vmem:[#allocation5 + $0x170] sm:$0xff]
    %v222 = vld [vmem:[#allocation5 + $0x178] sm:$0xff]
    %v223 = vld [vmem:[#allocation5 + $0x180] sm:$0xff]
    %v224 = vld [vmem:[#allocation5 + $0x188] sm:$0xff]
    %v225 = vld [vmem:[#allocation5 + $0x190] sm:$0xff]
    %v226 = vld [vmem:[#allocation5 + $0x198] sm:$0xff]
    %v227 = vld [vmem:[#allocation5 + $0x1a0] sm:$0xff]
    %v228 = vld [vmem:[#allocation5 + $0x1a8] sm:$0xff]
    %v229 = vld [vmem:[#allocation5 + $0x1b0] sm:$0xff]
    %v230 = vld [vmem:[#allocation5 + $0x1b8] sm:$0xff]
    %v231 = vld [vmem:[#allocation5 + $0x1c0] sm:$0xff]
    %v232 = vld [vmem:[#allocation5 + $0x1c8] sm:$0xff]
    %v233 = vld [vmem:[#allocation5 + $0x1d0] sm:$0xff]
    %v234 = vld [vmem:[#allocation5 + $0x1d8] sm:$0xff]
    %v235 = vld [vmem:[#allocation5 + $0x1e0] sm:$0xff]
    %v236 = vld [vmem:[#allocation5 + $0x1e8] sm:$0xff]
    %v237 = vld [vmem:[#allocation5 + $0x1f0] sm:$0xff]
    %v238 = vld [vmem:[#allocation5 + $0x1f8] sm:$0xff]
    %v239 = vld [vmem:[#allocation5 + $0x200] sm:$0xff]
    %v240 = vld [vmem:[#allocation5 + $0x208] sm:$0xff]
    %v241 = vld [vmem:[#allocation5 + $0x210] sm:$0xff]
    %v242 = vld [vmem:[#allocation5 + $0x218] sm:$0xff]
    %v243 = vld [vmem:[#allocation5 + $0x220] sm:$0xff]
    %v244 = vld [vmem:[#allocation5 + $0x228] sm:$0xff]
    %v245 = vld [vmem:[#allocation5 + $0x230] sm:$0xff]
    %v246 = vld [vmem:[#allocation5 + $0x238] sm:$0xff]
    %v247 = vld [vmem:[#allocation5 + $0x240] sm:$0xff]
    %v248 = vld [vmem:[#allocation5 + $0x248] sm:$0xff]
    %v249 = vld [vmem:[#allocation5 + $0x250] sm:$0xff]
    %v250 = vld [vmem:[#allocation5 + $0x258] sm:$0xff]
    %v251 = vld [vmem:[#allocation5 + $0x260] sm:$0xff]
    %v252 = vld [vmem:[#allocation5 + $0x268] sm:$0xff]
    %v253 = vld [vmem:[#allocation5 + $0x270] sm:$0xff]
    %v254 = vld [vmem:[#allocation5 + $0x278] sm:$0xff]
    %v255 = vld [vmem:[#allocation5 + $0x280] sm:$0xff]
    %v256 = vld [vmem:[#allocation5 + $0x288] sm:$0xff]
    %v257 = vld [vmem:[#allocation5 + $0x290] sm:$0xff]
    %v258 = vld [vmem:[#allocation5 + $0x298] sm:$0xff]
    %v259 = vld [vmem:[#allocation5 + $0x2a0] sm:$0xff]
    %v260 = vld [vmem:[#allocation5 + $0x2a8] sm:$0xff]
    %v261 = vld [vmem:[#allocation5 + $0x2b0] sm:$0xff]
    %v262 = vld [vmem:[#allocation5 + $0x2b8] sm:$0xff]
    %v263 = vld [vmem:[#allocation5 + $0x2c0] sm:$0xff]
    %v264 = vld [vmem:[#allocation5 + $0x2c8] sm:$0xff]
    %v265 = vld [vmem:[#allocation5 + $0x2d0] sm:$0xff]
    %v266 = vld [vmem:[#allocation5 + $0x2d8] sm:$0xff]
    %v267 = vld [vmem:[#allocation5 + $0x2e0] sm:$0xff]
    %v268 = vld [vmem:[#allocation5 + $0x2e8] sm:$0xff]
    %v269 = vld [vmem:[#allocation5 + $0x2f0] sm:$0xff]
    %v270 = vld [vmem:[#allocation5 + $0x2f8] sm:$0xff]
    %v271 = vld [vmem:[#allocation5 + $0x300] sm:$0xff]
    %v272 = vld [vmem:[#allocation5 + $0x308] sm:$0xff]
    %v273 = vld [vmem:[#allocation5 + $0x310] sm:$0xff]
    %v274 = vld [vmem:[#allocation5 + $0x318] sm:$0xff]
    %v275 = vld [vmem:[#allocation5 + $0x320] sm:$0xff]
    %v276 = vld [vmem:[#allocation5 + $0x328] sm:$0xff]
    %v277 = vld [vmem:[#allocation5 + $0x330] sm:$0xff]
    %v278 = vld [vmem:[#allocation5 + $0x338] sm:$0xff]
    %v279 = vld [vmem:[#allocation5 + $0x340] sm:$0xff]
    %v280 = vld [vmem:[#allocation5 + $0x348] sm:$0xff]
    %v281 = vld [vmem:[#allocation5 + $0x350] sm:$0xff]
    %v282 = vld [vmem:[#allocation5 + $0x358] sm:$0xff]
    %v283 = vld [vmem:[#allocation5 + $0x360] sm:$0xff]
    %v284 = vld [vmem:[#allocation5 + $0x368] sm:$0xff]
    %v285 = vld [vmem:[#allocation5 + $0x370] sm:$0xff]
    %v286 = vld [vmem:[#allocation5 + $0x378] sm:$0xff]
    %v287 = vld [vmem:[#allocation5 + $0x380] sm:$0xff]
    %v288 = vld [vmem:[#allocation5 + $0x388] sm:$0xff]
    %v289 = vld [vmem:[#allocation5 + $0x390] sm:$0xff]
    %v290 = vld [vmem:[#allocation5 + $0x398] sm:$0xff]
    %v291 = vld [vmem:[#allocation5 + $0x3a0] sm:$0xff]
    %v292 = vld [vmem:[#allocation5 + $0x3a8] sm:$0xff]
    %v293 = vld [vmem:[#allocation5 + $0x3b0] sm:$0xff]
    %v294 = vld [vmem:[#allocation5 + $0x3b8] sm:$0xff]
    %v295 = vld [vmem:[#allocation5 + $0x3c0] sm:$0xff]
    %v296 = vld [vmem:[#allocation5 + $0x3c8] sm:$0xff]
    %v297 = vld [vmem:[#allocation5 + $0x3d0] sm:$0xff]
    %v298 = vld [vmem:[#allocation5 + $0x3d8] sm:$0xff]
    %v299 = vld [vmem:[#allocation5 + $0x3e0] sm:$0xff]
    %v300 = vld [vmem:[#allocation5 + $0x3e8] sm:$0xff]
    %v301 = vld [vmem:[#allocation5 + $0x3f0] sm:$0xff]
    %v302 = vld [vmem:[#allocation5 + $0x3f8] sm:$0xff]
    %v303 = vld [vmem:[#allocation5 + $0x400] sm:$0xff]
    %v304 = vld [vmem:[#allocation5 + $0x408] sm:$0xff]
    %v305 = vsub.f32 %v45, %v175
    %v306 = vsub.f32 %v46, %v176
    %v307 = vsub.f32 %v47, %v177
    %v308 = vsub.f32 %v48, %v178
    %v309 = vsub.f32 %v49, %v179
    %v310 = vsub.f32 %v50, %v180
    %v311 = vsub.f32 %v51, %v181
    %v312 = vsub.f32 %v52, %v182
    %v313 = vsub.f32 %v53, %v183
    %v314 = vsub.f32 %v54, %v184
    %v315 = vsub.f32 %v55, %v185
    %v316 = vsub.f32 %v56, %v186
    %v317 = vsub.f32 %v57, %v187
    %v318 = vsub.f32 %v58, %v188
    %v319 = vsub.f32 %v59, %v189
    %v320 = vsub.f32 %v60, %v190
    %v321 = vsub.f32 %v61, %v191
    %v322 = vsub.f32 %v62, %v192
    %v323 = vsub.f32 %v63, %v193
    %v324 = vsub.f32 %v64, %v194
    %v325 = vsub.f32 %v65, %v195
    %v326 = vsub.f32 %v66, %v196
    %v327 = vsub.f32 %v67, %v197
    %v328 = vsub.f32 %v68, %v198
    %v329 = vsub.f32 %v69, %v199
    %v330 = vsub.f32 %v70, %v200
    %v331 = vsub.f32 %v71, %v201
    %v332 = vsub.f32 %v72, %v202
    %v333 = vsub.f32 %v73, %v203
    %v334 = vsub.f32 %v74, %v204
    %v335 = vsub.f32 %v75, %v205
    %v336 = vsub.f32 %v76, %v206
    %v337 = vsub.f32 %v77, %v207
    %v338 = vsub.f32 %v78, %v208
    %v339 = vsub.f32 %v79, %v209
    %v340 = vsub.f32 %v80, %v210
    %v341 = vsub.f32 %v81, %v211
    %v342 = vsub.f32 %v82, %v212
    %v343 = vsub.f32 %v83, %v213
    %v344 = vsub.f32 %v84, %v214
    %v345 = vsub.f32 %v85, %v215
    %v346 = vsub.f32 %v86, %v216
    %v347 = vsub.f32 %v87, %v217
    %v348 = vsub.f32 %v88, %v218
    %v349 = vsub.f32 %v89, %v219
    %v350 = vsub.f32 %v90, %v220
    %v351 = vsub.f32 %v91, %v221
    %v352 = vsub.f32 %v92, %v222
    %v353 = vsub.f32 %v93, %v223
    %v354 = vsub.f32 %v94, %v224
    %v355 = vsub.f32 %v95, %v225
    %v356 = vsub.f32 %v96, %v226
    %v357 = vsub.f32 %v97, %v227
    %v358 = vsub.f32 %v98, %v228
    %v359 = vsub.f32 %v99, %v229
    %v360 = vsub.f32 %v100, %v230
    %v361 = vsub.f32 %v101, %v231
    %v362 = vsub.f32 %v102, %v232
    %v363 = vsub.f32 %v103, %v233
    %v364 = vsub.f32 %v104, %v234
    %v365 = vsub.f32 %v105, %v235
    %v366 = vsub.f32 %v106, %v236
    %v367 = vsub.f32 %v107, %v237
    %v368 = vsub.f32 %v108, %v238
    %v369 = vsub.f32 %v109, %v239
    %v370 = vsub.f32 %v110, %v240
    %v371 = vsub.f32 %v111, %v241
    %v372 = vsub.f32 %v112, %v242
    %v373 = vsub.f32 %v113, %v243
    %v374 = vsub.f32 %v114, %v244
    %v375 = vsub.f32 %v115, %v245
    %v376 = vsub.f32 %v116, %v246
    %v377 = vsub.f32 %v117, %v247
    %v378 = vsub.f32 %v118, %v248
    %v379 = vsub.f32 %v119, %v249
    %v380 = vsub.f32 %v120, %v250
    %v381 = vsub.f32 %v121, %v251
    %v382 = vsub.f32 %v122, %v252
    %v383 = vsub.f32 %v123, %v253
    %v384 = vsub.f32 %v124, %v254
    %v385 = vsub.f32 %v125, %v255
    %v386 = vsub.f32 %v126, %v256
    %v387 = vsub.f32 %v127, %v257
    %v388 = vsub.f32 %v128, %v258
    %v389 = vsub.f32 %v129, %v259
    %v390 = vsub.f32 %v130, %v260
    %v391 = vsub.f32 %v131, %v261
    %v392 = vsub.f32 %v132, %v262
    %v393 = vsub.f32 %v133, %v263
    %v394 = vsub.f32 %v134, %v264
    %v395 = vsub.f32 %v135, %v265
    %v396 = vsub.f32 %v136, %v266
    %v397 = vsub.f32 %v137, %v267
    %v398 = vsub.f32 %v138, %v268
    %v399 = vsub.f32 %v139, %v269
    %v400 = vsub.f32 %v140, %v270
    %v401 = vsub.f32 %v141, %v271
    %v402 = vsub.f32 %v142, %v272
    %v403 = vsub.f32 %v143, %v273
    %v404 = vsub.f32 %v144, %v274
    %v405 = vsub.f32 %v145, %v275
    %v406 = vsub.f32 %v146, %v276
    %v407 = vsub.f32 %v147, %v277
    %v408 = vsub.f32 %v148, %v278
    %v409 = vsub.f32 %v149, %v279
    %v410 = vsub.f32 %v150, %v280
    %v411 = vsub.f32 %v151, %v281
    %v412 = vsub.f32 %v152, %v282
    %v413 = vsub.f32 %v153, %v283
    %v414 = vsub.f32 %v154, %v284
    %v415 = vsub.f32 %v155, %v285
    %v416 = vsub.f32 %v156, %v286
    %v417 = vsub.f32 %v157, %v287
    %v418 = vsub.f32 %v158, %v288
    %v419 = vsub.f32 %v159, %v289
    %v420 = vsub.f32 %v160, %v290
    %v421 = vsub.f32 %v161, %v291
    %v422 = vsub.f32 %v162, %v292
    %v423 = vsub.f32 %v163, %v293
    %v424 = vsub.f32 %v164, %v294
    %v425 = vsub.f32 %v165, %v295
    %v426 = vsub.f32 %v166, %v296
    %v427 = vsub.f32 %v167, %v297
    %v428 = vsub.f32 %v168, %v298
    %v429 = vsub.f32 %v169, %v299
    %v430 = vsub.f32 %v170, %v300
    %v431 = vsub.f32 %v171, %v301
    %v432 = vsub.f32 %v172, %v302
    %v433 = vsub.f32 %v173, %v303
    %v434 = vsub.f32 %v174, %v304
    %v435 = vmul.f32 %v305, %v305
    %v436 = vmul.f32 %v306, %v306
    %v437 = vmul.f32 %v307, %v307
    %v438 = vmul.f32 %v308, %v308
    %v439 = vmul.f32 %v309, %v309
    %v440 = vmul.f32 %v310, %v310
    %v441 = vmul.f32 %v311, %v311
    %v442 = vmul.f32 %v312, %v312
    %v443 = vmul.f32 %v313, %v313
    %v444 = vmul.f32 %v314, %v314
    %v445 = vmul.f32 %v315, %v315
    %v446 = vmul.f32 %v316, %v316
    %v447 = vmul.f32 %v317, %v317
    %v448 = vmul.f32 %v318, %v318
    %v449 = vmul.f32 %v319, %v319
    %v450 = vmul.f32 %v320, %v320
    %v451 = vmul.f32 %v321, %v321
    %v452 = vmul.f32 %v322, %v322
    %v453 = vmul.f32 %v323, %v323
    %v454 = vmul.f32 %v324, %v324
    %v455 = vmul.f32 %v325, %v325
    %v456 = vmul.f32 %v326, %v326
    %v457 = vmul.f32 %v327, %v327
    %v458 = vmul.f32 %v328, %v328
    %v459 = vmul.f32 %v329, %v329
    %v460 = vmul.f32 %v330, %v330
    %v461 = vmul.f32 %v331, %v331
    %v462 = vmul.f32 %v332, %v332
    %v463 = vmul.f32 %v333, %v333
    %v464 = vmul.f32 %v334, %v334
    %v465 = vmul.f32 %v335, %v335
    %v466 = vmul.f32 %v336, %v336
    %v467 = vmul.f32 %v337, %v337
    %v468 = vmul.f32 %v338, %v338
    %v469 = vmul.f32 %v339, %v339
    %v470 = vmul.f32 %v340, %v340
    %v471 = vmul.f32 %v341, %v341
    %v472 = vmul.f32 %v342, %v342
    %v473 = vmul.f32 %v343, %v343
    %v474 = vmul.f32 %v344, %v344
    %v475 = vmul.f32 %v345, %v345
    %v476 = vmul.f32 %v346, %v346
    %v477 = vmul.f32 %v347, %v347
    %v478 = vmul.f32 %v348, %v348
    %v479 = vmul.f32 %v349, %v349
    %v480 = vmul.f32 %v350, %v350
    %v481 = vmul.f32 %v351, %v351
    %v482 = vmul.f32 %v352, %v352
    %v483 = vmul.f32 %v353, %v353
    %v484 = vmul.f32 %v354, %v354
    %v485 = vmul.f32 %v355, %v355
    %v486 = vmul.f32 %v356, %v356
    %v487 = vmul.f32 %v357, %v357
    %v488 = vmul.f32 %v358, %v358
    %v489 = vmul.f32 %v359, %v359
    %v490 = vmul.f32 %v360, %v360
    %v491 = vmul.f32 %v361, %v361
    %v492 = vmul.f32 %v362, %v362
    %v493 = vmul.f32 %v363, %v363
    %v494 = vmul.f32 %v364, %v364
    %v495 = vmul.f32 %v365, %v365
    %v496 = vmul.f32 %v366, %v366
    %v497 = vmul.f32 %v367, %v367
    %v498 = vmul.f32 %v368, %v368
    %v499 = vmul.f32 %v369, %v369
    %v500 = vmul.f32 %v370, %v370
    %v501 = vmul.f32 %v371, %v371
    %v502 = vmul.f32 %v372, %v372
    %v503 = vmul.f32 %v373, %v373
    %v504 = vmul.f32 %v374, %v374
    %v505 = vmul.f32 %v375, %v375
    %v506 = vmul.f32 %v376, %v376
    %v507 = vmul.f32 %v377, %v377
    %v508 = vmul.f32 %v378, %v378
    %v509 = vmul.f32 %v379, %v379
    %v510 = vmul.f32 %v380, %v380
    %v511 = vmul.f32 %v381, %v381
    %v512 = vmul.f32 %v382, %v382
    %v513 = vmul.f32 %v383, %v383
    %v514 = vmul.f32 %v384, %v384
    %v515 = vmul.f32 %v385, %v385
    %v516 = vmul.f32 %v386, %v386
    %v517 = vmul.f32 %v387, %v387
    %v518 = vmul.f32 %v388, %v388
    %v519 = vmul.f32 %v389, %v389
    %v520 = vmul.f32 %v390, %v390
    %v521 = vmul.f32 %v391, %v391
    %v522 = vmul.f32 %v392, %v392
    %v523 = vmul.f32 %v393, %v393
    %v524 = vmul.f32 %v394, %v394
    %v525 = vmul.f32 %v395, %v395
    %v526 = vmul.f32 %v396, %v396
    %v527 = vmul.f32 %v397, %v397
    %v528 = vmul.f32 %v398, %v398
    %v529 = vmul.f32 %v399, %v399
    %v530 = vmul.f32 %v400, %v400
    %v531 = vmul.f32 %v401, %v401
    %v532 = vmul.f32 %v402, %v402
    %v533 = vmul.f32 %v403, %v403
    %v534 = vmul.f32 %v404, %v404
    %v535 = vmul.f32 %v405, %v405
    %v536 = vmul.f32 %v406, %v406
    %v537 = vmul.f32 %v407, %v407
    %v538 = vmul.f32 %v408, %v408
    %v539 = vmul.f32 %v409, %v409
    %v540 = vmul.f32 %v410, %v410
    %v541 = vmul.f32 %v411, %v411
    %v542 = vmul.f32 %v412, %v412
    %v543 = vmul.f32 %v413, %v413
    %v544 = vmul.f32 %v414, %v414
    %v545 = vmul.f32 %v415, %v415
    %v546 = vmul.f32 %v416, %v416
    %v547 = vmul.f32 %v417, %v417
    %v548 = vmul.f32 %v418, %v418
    %v549 = vmul.f32 %v419, %v419
    %v550 = vmul.f32 %v420, %v420
    %v551 = vmul.f32 %v421, %v421
    %v552 = vmul.f32 %v422, %v422
    %v553 = vmul.f32 %v423, %v423
    %v554 = vmul.f32 %v424, %v424
    %v555 = vmul.f32 %v425, %v425
    %v556 = vmul.f32 %v426, %v426
    %v557 = vmul.f32 %v427, %v427
    %v558 = vmul.f32 %v428, %v428
    %v559 = vmul.f32 %v429, %v429
    %v560 = vmul.f32 %v430, %v430
    %v561 = vmul.f32 %v431, %v431
    %v562 = vmul.f32 %v432, %v432
    %v563 = vmul.f32 %v433, %v433
    %v564 = vmul.f32 %v434, %v434
    %v565 = vld [vmem:[#allocation7] sm:$0xff]
    %v566 = vadd.f32 %v435, %v436
    %v567 = vadd.f32 %v566, %v437
    %v568 = vadd.f32 %v567, %v438
    %v569 = vadd.f32 %v568, %v439
    %v570 = vadd.f32 %v569, %v440
    %v571 = vadd.f32 %v570, %v441
    %v572 = vadd.f32 %v571, %v442
    %v573 = vadd.f32 %v572, %v443
    %v574 = vadd.f32 %v573, %v444
    %v575 = vadd.f32 %v574, %v445
    %v576 = vadd.f32 %v575, %v446
    %v577 = vadd.f32 %v576, %v447
    %v578 = vadd.f32 %v577, %v448
    %v579 = vadd.f32 %v578, %v449
    %v580 = vadd.f32 %v579, %v450
    %v581 = vadd.f32 %v580, %v451
    %v582 = vadd.f32 %v581, %v452
    %v583 = vadd.f32 %v582, %v453
    %v584 = vadd.f32 %v583, %v454
    %v585 = vadd.f32 %v584, %v455
    %v586 = vadd.f32 %v585, %v456
    %v587 = vadd.f32 %v586, %v457
    %v588 = vadd.f32 %v587, %v458
    %v589 = vadd.f32 %v588, %v459
    %v590 = vadd.f32 %v589, %v460
    %v591 = vadd.f32 %v590, %v461
    %v592 = vadd.f32 %v591, %v462
    %v593 = vadd.f32 %v592, %v463
    %v594 = vadd.f32 %v593, %v464
    %v595 = vadd.f32 %v594, %v465
    %v596 = vadd.f32 %v595, %v466
    %v597 = vadd.f32 %v596, %v467
    %v598 = vadd.f32 %v597, %v468
    %v599 = vadd.f32 %v598, %v469
    %v600 = vadd.f32 %v599, %v470
    %v601 = vadd.f32 %v600, %v471
    %v602 = vadd.f32 %v601, %v472
    %v603 = vadd.f32 %v602, %v473
    %v604 = vadd.f32 %v603, %v474
    %v605 = vadd.f32 %v604, %v475
    %v606 = vadd.f32 %v605, %v476
    %v607 = vadd.f32 %v606, %v477
    %v608 = vadd.f32 %v607, %v478
    %v609 = vadd.f32 %v608, %v479
    %v610 = vadd.f32 %v609, %v480
    %v611 = vadd.f32 %v610, %v481
    %v612 = vadd.f32 %v611, %v482
    %v613 = vadd.f32 %v612, %v483
    %v614 = vadd.f32 %v613, %v484
    %v615 = vadd.f32 %v614, %v485
    %v616 = vadd.f32 %v615, %v486
    %v617 = vadd.f32 %v616, %v487
    %v618 = vadd.f32 %v617, %v488
    %v619 = vadd.f32 %v618, %v489
    %v620 = vadd.f32 %v619, %v490
    %v621 = vadd.f32 %v620, %v491
    %v622 = vadd.f32 %v621, %v492
    %v623 = vadd.f32 %v622, %v493
    %v624 = vadd.f32 %v623, %v494
    %v625 = vadd.f32 %v624, %v495
    %v626 = vadd.f32 %v625, %v496
    %v627 = vadd.f32 %v626, %v497
    %v628 = vadd.f32 %v627, %v498
    %v629 = vadd.f32 %v628, %v499
    %v630 = vadd.f32 %v629, %v500
    %v631 = vadd.f32 %v630, %v501
    %v632 = vadd.f32 %v631, %v502
    %v633 = vadd.f32 %v632, %v503
    %v634 = vadd.f32 %v633, %v504
    %v635 = vadd.f32 %v634, %v505
    %v636 = vadd.f32 %v635, %v506
    %v637 = vadd.f32 %v636, %v507
    %v638 = vadd.f32 %v637, %v508
    %v639 = vadd.f32 %v638, %v509
    %v640 = vadd.f32 %v639, %v510
    %v641 = vadd.f32 %v640, %v511
    %v642 = vadd.f32 %v641, %v512
    %v643 = vadd.f32 %v642, %v513
    %v644 = vadd.f32 %v643, %v514
    %v645 = vadd.f32 %v644, %v515
    %v646 = vadd.f32 %v645, %v516
    %v647 = vadd.f32 %v646, %v517
    %v648 = vadd.f32 %v647, %v518
    %v649 = vadd.f32 %v648, %v519
    %v650 = vadd.f32 %v649, %v520
    %v651 = vadd.f32 %v650, %v521
    %v652 = vadd.f32 %v651, %v522
    %v653 = vadd.f32 %v652, %v523
    %v654 = vadd.f32 %v653, %v524
    %v655 = vadd.f32 %v654, %v525
    %v656 = vadd.f32 %v655, %v526
    %v657 = vadd.f32 %v656, %v527
    %v658 = vadd.f32 %v657, %v528
    %v659 = vadd.f32 %v658, %v529
    %v660 = vadd.f32 %v659, %v530
    %v661 = vadd.f32 %v660, %v531
    %v662 = vadd.f32 %v661, %v532
    %v663 = vadd.f32 %v662, %v533
    %v664 = vadd.f32 %v663, %v534
    %v665 = vadd.f32 %v664, %v535
    %v666 = vadd.f32 %v665, %v536
    %v667 = vadd.f32 %v666, %v537
    %v668 = vadd.f32 %v667, %v538
    %v669 = vadd.f32 %v668, %v539
    %v670 = vadd.f32 %v669, %v540
    %v671 = vadd.f32 %v670, %v541
    %v672 = vadd.f32 %v671, %v542
    %v673 = vadd.f32 %v672, %v543
    %v674 = vadd.f32 %v673, %v544
    %v675 = vadd.f32 %v674, %v545
    %v676 = vadd.f32 %v675, %v546
    %v677 = vadd.f32 %v676, %v547
    %v678 = vadd.f32 %v677, %v548
    %v679 = vadd.f32 %v678, %v549
    %v680 = vadd.f32 %v679, %v550
    %v681 = vadd.f32 %v680, %v551
    %v682 = vadd.f32 %v681, %v552
    %v683 = vadd.f32 %v682, %v553
    %v684 = vadd.f32 %v683, %v554
    %v685 = vadd.f32 %v684, %v555
    %v686 = vadd.f32 %v685, %v556
    %v687 = vadd.f32 %v686, %v557
    %v688 = vadd.f32 %v687, %v558
    %v689 = vadd.f32 %v688, %v559
    %v690 = vadd.f32 %v689, %v560
    %v691 = vadd.f32 %v690, %v561
    %v692 = vadd.f32 %v691, %v562
    %v693 = vadd.f32 %v692, %v563
    %v694 = vadd.f32 %v693, %v564
    %v695 = vadd.f32 %v565, %v694
    %696 = vst [vmem:[#allocation7] sm:$0xff] %v695
    // Predicated region
    $region22: #{tpu_custom_call.1} parent=1 // pred_check
      _
    $region23: #{tpu_custom_call.1} parent=1 // pred_check_branch
      %698 = sbr.rel (0) target = $region25
    $region24: #{tpu_custom_call.1} parent=1 // pred_region
      %s700 = ssub.s32 128, 128
      %701 = vsyncadd [#allocation4], %s700
      %s703 = sshll.u32 [#allocation7], 4
      %s704 = int_to_ptr.vmem [resolvable:$true] %s703
      %706 = dma.vmem_to_hbm [thread:$0]  %s704, 128, %s2, [#allocation4]
    $region25: #{tpu_custom_call.1} parent=1 // pred_fallthru
      _
    // Predicated region
    $region26: #{tpu_custom_call.1} parent=1 // pred_check
      _
    $region27: #{tpu_custom_call.1} parent=1 // pred_check_branch
      %708 = sbr.rel (0) target = $region29
    $region28: #{tpu_custom_call.1} parent=1 // pred_region
      %709 = dma.done [#allocation4], 128
    $region29: #{tpu_custom_call.1} parent=1 // pred_fallthru
      _
    %710 = vsyncpa [#allocation3], 1
    %711 = vsyncpa [#allocation6], 1
    %712 = vsyncpa [#allocation4], 1

</llo_original>
